<compile_context>
chip_gen: v5e
topology: v5e:2x2
jax: 0.10.0
libtpu: 0.0.40
codegen_flags: <defaults>
</compile_context>

<pallas_src>
import functools

import jax
import jax.numpy as jnp
from jax import lax
from jax.experimental import pallas as pl
from jax.experimental.pallas import tpu as pltpu


def _fused_conv_block_kernel(x_ref, w1_ref, sc1_ref, sh1_ref,
                             w2_ref, sc2_ref, sh2_ref,
                             out_ref, xp_scr, y1p_scr, *, H, W, Cin, Cout):
    """One batch element: conv1+BN+ReLU -> (dropout=id) -> conv2+BN+ReLU, all in VMEM.

    x_ref   : (1, H, W*Cin)            unpadded input rows (lane-flattened NHWC)
    w*_ref  : (3, W*Cin_l, W*Cout)     banded row-matmul weights, one slab per ky
    sc*/sh* : (1, W*Cout)              folded-BN scale/shift tiled to the output lane layout
    out_ref : (1, H, W*Cout)           lane-dense output rows
    xp_scr  : (H+2, W*Cin)   VMEM      row-padded input
    y1p_scr : (H+2, W*Cout)  VMEM      row-padded conv1 activation (never leaves VMEM)
    """
    f32 = jnp.float32

    # ---- in-kernel zero padding of the input rows (no host-side jnp.pad) ----
    xp_scr[...] = jnp.zeros_like(xp_scr)
    xp_scr[1:H + 1, :] = x_ref[0]

    # ---- conv1: 3 banded row-matmuls (M=H, K=W*Cin, N=W*Cout) + folded BN + ReLU ----
    acc1 = jnp.dot(xp_scr[0:H, :], w1_ref[0], preferred_element_type=f32)
    for ky in (1, 2):  # statically unrolled: 3 MXU pushes total
        acc1 = acc1 + jnp.dot(xp_scr[ky:ky + H, :], w1_ref[ky],
                              preferred_element_type=f32)
    y1 = jnp.maximum(acc1 * sc1_ref[...] + sh1_ref[...], 0.0)
    # Dropout(p=0.3) is identity at inference time.

    # ---- re-pad the intermediate entirely in VMEM (no HBM round trip) ----
    y1p_scr[...] = jnp.zeros_like(y1p_scr)
    y1p_scr[1:H + 1, :] = y1

    # ---- conv2: 3 banded row-matmuls (M=H, K=W*Cout, N=W*Cout) + folded BN + ReLU ----
    acc2 = jnp.dot(y1p_scr[0:H, :], w2_ref[0], preferred_element_type=f32)
    for ky in (1, 2):
        acc2 = acc2 + jnp.dot(y1p_scr[ky:ky + H, :], w2_ref[ky],
                              preferred_element_type=f32)
    y2 = jnp.maximum(acc2 * sc2_ref[...] + sh2_ref[...], 0.0)

    # lane-dense store: last dim is W*Cout (== 128 at the demo sizes)
    out_ref[0] = y2.astype(out_ref.dtype)


def make_banded_weights(w_oihw, W, dtype=jnp.float32):
    """Torch conv weight (Cout, Cin, 3, 3) -> (3, W*Cin, W*Cout) banded row-matmul weights.

    B[ky][w_in*Cin + c, w_out*Cout + o] = w[o, c, ky, kx]  with  w_in = w_out + kx - 1.
    Horizontal zero-padding is implicit: out-of-range w_in rows simply don't exist.
    Vertical zero-padding is handled by the row-padded VMEM scratch in the kernel.
    """
    Cout, Cin = w_oihw.shape[0], w_oihw.shape[1]
    wk = jnp.transpose(w_oihw, (2, 3, 1, 0)).astype(dtype)          # (ky, kx, Cin, Cout)
    w_in = jnp.arange(W)
    w_out = jnp.arange(W)
    bands = []
    for ky in range(3):
        acc = jnp.zeros((W, Cin, W, Cout), dtype)
        for kx in range(3):
            sel = (w_in[:, None] == (w_out[None, :] + kx - 1)).astype(dtype)   # (W, W)
            acc = acc + sel[:, None, :, None] * wk[ky, kx][None, :, None, :]
        bands.append(acc.reshape(W * Cin, W * Cout))
    return jnp.stack(bands, axis=0)                                  # (3, W*Cin, W*Cout)


def fold_bn(conv_bias, gamma, beta, mean, var, W, eps=1e-5):
    """Fold conv bias + BatchNorm running stats into scale/shift, tiled to (1, W*Cout)."""
    scale = gamma / jnp.sqrt(var + eps)
    shift = beta + (conv_bias - mean) * scale
    return (jnp.tile(scale, W).reshape(1, -1).astype(jnp.float32),
            jnp.tile(shift, W).reshape(1, -1).astype(jnp.float32))


def conv_block_nhwc(x_nhwc, w1, b1, g1, be1, m1, v1, w2, b2, g2, be2, m2, v2):
    """Fast path: NHWC in, NHWC out, single fused pallas_call (no layout transposes)."""
    N, H, W, Cin = x_nhwc.shape
    Cout = w1.shape[0]

    w1b = make_banded_weights(w1, W)          # (3, W*Cin,  W*Cout)
    w2b = make_banded_weights(w2, W)          # (3, W*Cout, W*Cout)
    sc1, sh1 = fold_bn(b1, g1, be1, m1, v1, W)
    sc2, sh2 = fold_bn(b2, g2, be2, m2, v2, W)

    x_rows = x_nhwc.reshape(N, H, W * Cin)    # free, contiguous reshape

    out_rows = pl.pallas_call(
        functools.partial(_fused_conv_block_kernel, H=H, W=W, Cin=Cin, Cout=Cout),
        out_shape=jax.ShapeDtypeStruct((N, H, W * Cout), jnp.float32),
        grid_spec=pltpu.PrefetchScalarGridSpec(
            num_scalar_prefetch=0,
            grid=(N,),
            in_specs=[
                pl.BlockSpec((1, H, W * Cin), lambda n: (n, 0, 0)),
                # constant index_maps: weights / affine params DMA'd once, not per step
                pl.BlockSpec((3, W * Cin, W * Cout), lambda n: (0, 0, 0)),
                pl.BlockSpec((1, W * Cout), lambda n: (0, 0)),
                pl.BlockSpec((1, W * Cout), lambda n: (0, 0)),
                pl.BlockSpec((3, W * Cout, W * Cout), lambda n: (0, 0, 0)),
                pl.BlockSpec((1, W * Cout), lambda n: (0, 0)),
                pl.BlockSpec((1, W * Cout), lambda n: (0, 0)),
            ],
            out_specs=pl.BlockSpec((1, H, W * Cout), lambda n: (n, 0, 0)),
            scratch_shapes=[
                pltpu.VMEM((H + 2, W * Cin), jnp.float32),    # row-padded input
                pltpu.VMEM((H + 2, W * Cout), jnp.float32),   # row-padded conv1 activation
            ],
        ),
        compiler_params=pltpu.CompilerParams(
            dimension_semantics=("parallel",)),               # batch axis across TCs (v7x)
    )(x_rows, w1b, sc1, sh1, w2b, sc2, sh2)

    return out_rows.reshape(N, H, W, Cout)    # free, contiguous reshape


@jax.jit
def conv_block_forward(x_nchw, *params):
    """PyTorch-parity wrapper: NCHW in / NCHW out (transposes only at the model boundary;
    keep the surrounding model in NHWC and call conv_block_nhwc directly to avoid them)."""
    x = jnp.transpose(x_nchw, (0, 2, 3, 1))   # NCHW -> NHWC
    y = conv_block_nhwc(x, *params)
    return jnp.transpose(y, (0, 3, 1, 2))     # NHWC -> NCHW


def _reference(x_nchw, w1, b1, g1, be1, m1, v1, w2, b2, g2, be2, m2, v2):
    """Plain-JAX reference (lax conv) used only for validation."""
    def conv_bn_relu_ref(x, w, b, g, be, m, v, eps=1e-5):
        wh = jnp.transpose(w, (2, 3, 1, 0))   # OIHW -> HWIO
        y = lax.conv_general_dilated(x, wh, (1, 1), "SAME",
                                     dimension_numbers=("NHWC", "HWIO", "NHWC"))
        s = g / jnp.sqrt(v + eps)
        sh = be + (b - m) * s
        return jnp.maximum(y * s + sh, 0.0)

    x = jnp.transpose(x_nchw, (0, 2, 3, 1))
    y1 = conv_bn_relu_ref(x, w1, b1, g1, be1, m1, v1)
    y2 = conv_bn_relu_ref(y1, w2, b2, g2, be2, m2, v2)
    return jnp.transpose(y2, (0, 3, 1, 2))


if __name__ == "__main__":
    N, Cin, Cout, H, W = 2, 4, 8, 16, 16      # W * Cout = 128 -> lane-dense output

    key = jax.random.PRNGKey(0)
    ks = jax.random.split(key, 13)

    x = jax.random.normal(ks[0], (N, Cin, H, W), dtype=jnp.float32)

    # conv1 + bn1 parameters (deterministic synthetic init)
    w1 = 0.2 * jax.random.normal(ks[1], (Cout, Cin, 3, 3), dtype=jnp.float32)
    b1 = 0.1 * jax.random.normal(ks[2], (Cout,), dtype=jnp.float32)
    g1 = 1.0 + 0.1 * jax.random.normal(ks[3], (Cout,), dtype=jnp.float32)
    be1 = 0.1 * jax.random.normal(ks[4], (Cout,), dtype=jnp.float32)
    m1 = 0.1 * jax.random.normal(ks[5], (Cout,), dtype=jnp.float32)
    v1 = 0.5 + 0.5 * jnp.abs(jax.random.normal(ks[6], (Cout,), dtype=jnp.float32))

    # conv2 + bn2 parameters
    w2 = 0.2 * jax.random.normal(ks[7], (Cout, Cout, 3, 3), dtype=jnp.float32)
    b2 = 0.1 * jax.random.normal(ks[8], (Cout,), dtype=jnp.float32)
    g2 = 1.0 + 0.1 * jax.random.normal(ks[9], (Cout,), dtype=jnp.float32)
    be2 = 0.1 * jax.random.normal(ks[10], (Cout,), dtype=jnp.float32)
    m2 = 0.1 * jax.random.normal(ks[11], (Cout,), dtype=jnp.float32)
    v2 = 0.5 + 0.5 * jnp.abs(jax.random.normal(ks[12], (Cout,), dtype=jnp.float32))

    params = (w1, b1, g1, be1, m1, v1, w2, b2, g2, be2, m2, v2)

    y = conv_block_forward(x, *params)
    y = jax.block_until_ready(y)

    # validate against the plain-JAX reference
    y_ref = _reference(x, *params)
    assert y.shape == (N, Cout, H, W)
    assert jnp.allclose(y, y_ref, atol=2e-4, rtol=2e-4), float(jnp.max(jnp.abs(y - y_ref)))

    print("KERNEL_OK")
</pallas_src>

<mosaic_0001>
module attributes {stable_mosaic.version = 11 : i64} {
  func.func @_fused_conv_block_kernel(%arg0: i32, %arg1: memref<1x16x64xf32, #tpu.memory_space<vmem>>, %arg2: memref<3x64x128xf32, #tpu.memory_space<vmem>>, %arg3: memref<1x128xf32, #tpu.memory_space<vmem>>, %arg4: memref<1x128xf32, #tpu.memory_space<vmem>>, %arg5: memref<3x128x128xf32, #tpu.memory_space<vmem>>, %arg6: memref<1x128xf32, #tpu.memory_space<vmem>>, %arg7: memref<1x128xf32, #tpu.memory_space<vmem>>, %arg8: memref<1x16x128xf32, #tpu.memory_space<vmem>>, %arg9: memref<18x64xf32, #tpu.memory_space<vmem>>, %arg10: memref<18x128xf32, #tpu.memory_space<vmem>>) attributes {dimension_semantics = [#tpu.dimension_semantics<parallel>], iteration_bounds = array<i64: 2>, scalar_prefetch = 0 : i64, scratch_operands = 2 : i64, tpu.core_type = #tpu.core_type<tc>, window_params = [{transform_indices = @transform_0, window_bounds = array<i64: 1, 16, 64>}, {pipeline_mode = #tpu.pipeline_mode<synchronous>, transform_indices = @transform_1, window_bounds = array<i64: 3, 64, 128>}, {pipeline_mode = #tpu.pipeline_mode<synchronous>, transform_indices = @transform_2, window_bounds = array<i64: 1, 128>}, {pipeline_mode = #tpu.pipeline_mode<synchronous>, transform_indices = @transform_3, window_bounds = array<i64: 1, 128>}, {pipeline_mode = #tpu.pipeline_mode<synchronous>, transform_indices = @transform_4, window_bounds = array<i64: 3, 128, 128>}, {pipeline_mode = #tpu.pipeline_mode<synchronous>, transform_indices = @transform_5, window_bounds = array<i64: 1, 128>}, {pipeline_mode = #tpu.pipeline_mode<synchronous>, transform_indices = @transform_6, window_bounds = array<i64: 1, 128>}, {transform_indices = @transform_7, window_bounds = array<i64: 1, 16, 128>}]} {
    %cst = arith.constant 0.000000e+00 : f32
    %0 = vector.broadcast %cst : f32 to vector<18x64xf32>
    %c0 = arith.constant 0 : index
    %c0_0 = arith.constant 0 : index
    %1 = vector.load %arg9[%c0, %c0_0] : memref<18x64xf32, #tpu.memory_space<vmem>>, vector<18x64xf32>
    tpu.vector_store %arg9[%c0, %c0_0], %0 {strides = array<i32>} : memref<18x64xf32, #tpu.memory_space<vmem>>, vector<18x64xf32>,
    %c0_1 = arith.constant 0 : index
    %c0_2 = arith.constant 0 : index
    %c0_3 = arith.constant 0 : index
    %2 = vector.load %arg1[%c0_1, %c0_2, %c0_3] : memref<1x16x64xf32, #tpu.memory_space<vmem>>, vector<1x16x64xf32>
    %3 = vector.shape_cast %2 : vector<1x16x64xf32> to vector<16x64xf32>
    %c1 = arith.constant 1 : index
    %c0_4 = arith.constant 0 : index
    %4 = vector.load %arg9[%c1, %c0_4] : memref<18x64xf32, #tpu.memory_space<vmem>>, vector<16x64xf32>
    tpu.vector_store %arg9[%c1, %c0_4], %3 {strides = array<i32>} : memref<18x64xf32, #tpu.memory_space<vmem>>, vector<16x64xf32>,
    %c0_5 = arith.constant 0 : index
    %c0_6 = arith.constant 0 : index
    %5 = vector.load %arg9[%c0_5, %c0_6] : memref<18x64xf32, #tpu.memory_space<vmem>>, vector<16x64xf32>
    %c0_7 = arith.constant 0 : index
    %c0_8 = arith.constant 0 : index
    %c0_9 = arith.constant 0 : index
    %6 = vector.load %arg2[%c0_7, %c0_8, %c0_9] : memref<3x64x128xf32, #tpu.memory_space<vmem>>, vector<1x64x128xf32>
    %7 = vector.shape_cast %6 : vector<1x64x128xf32> to vector<64x128xf32>
    %cst_10 = arith.constant dense<0.000000e+00> : vector<16x128xf32>
    %8 = tpu.matmul %5, %7, %cst_10 {dimension_numbers = #tpu.dot_dimension_numbers<[1], [0], [0], [1], [0, 0, 1, 1], [], []>} : vector<16x64xf32>, vector<64x128xf32>, vector<16x128xf32> -> vector<16x128xf32>
    %c1_11 = arith.constant 1 : index
    %c0_12 = arith.constant 0 : index
    %9 = vector.load %arg9[%c1_11, %c0_12] : memref<18x64xf32, #tpu.memory_space<vmem>>, vector<16x64xf32>
    %c1_13 = arith.constant 1 : index
    %c0_14 = arith.constant 0 : index
    %c0_15 = arith.constant 0 : index
    %10 = vector.load %arg2[%c1_13, %c0_14, %c0_15] : memref<3x64x128xf32, #tpu.memory_space<vmem>>, vector<1x64x128xf32>
    %11 = vector.shape_cast %10 : vector<1x64x128xf32> to vector<64x128xf32>
    %cst_16 = arith.constant dense<0.000000e+00> : vector<16x128xf32>
    %12 = tpu.matmul %9, %11, %cst_16 {dimension_numbers = #tpu.dot_dimension_numbers<[1], [0], [0], [1], [0, 0, 1, 1], [], []>} : vector<16x64xf32>, vector<64x128xf32>, vector<16x128xf32> -> vector<16x128xf32>
    %13 = arith.addf %8, %12 : vector<16x128xf32>
    %c2 = arith.constant 2 : index
    %c0_17 = arith.constant 0 : index
    %14 = vector.load %arg9[%c2, %c0_17] : memref<18x64xf32, #tpu.memory_space<vmem>>, vector<16x64xf32>
    %c2_18 = arith.constant 2 : index
    %c0_19 = arith.constant 0 : index
    %c0_20 = arith.constant 0 : index
    %15 = vector.load %arg2[%c2_18, %c0_19, %c0_20] : memref<3x64x128xf32, #tpu.memory_space<vmem>>, vector<1x64x128xf32>
    %16 = vector.shape_cast %15 : vector<1x64x128xf32> to vector<64x128xf32>
    %cst_21 = arith.constant dense<0.000000e+00> : vector<16x128xf32>
    %17 = tpu.matmul %14, %16, %cst_21 {dimension_numbers = #tpu.dot_dimension_numbers<[1], [0], [0], [1], [0, 0, 1, 1], [], []>} : vector<16x64xf32>, vector<64x128xf32>, vector<16x128xf32> -> vector<16x128xf32>
    %18 = arith.addf %13, %17 : vector<16x128xf32>
    %c0_22 = arith.constant 0 : index
    %c0_23 = arith.constant 0 : index
    %19 = vector.load %arg3[%c0_22, %c0_23] : memref<1x128xf32, #tpu.memory_space<vmem>>, vector<1x128xf32>
    %20 = vector.broadcast %19 : vector<1x128xf32> to vector<16x128xf32>
    %21 = arith.mulf %18, %20 : vector<16x128xf32>
    %c0_24 = arith.constant 0 : index
    %c0_25 = arith.constant 0 : index
    %22 = vector.load %arg4[%c0_24, %c0_25] : memref<1x128xf32, #tpu.memory_space<vmem>>, vector<1x128xf32>
    %23 = vector.broadcast %22 : vector<1x128xf32> to vector<16x128xf32>
    %24 = arith.addf %21, %23 : vector<16x128xf32>
    %cst_26 = arith.constant 0.000000e+00 : f32
    %25 = vector.broadcast %cst_26 : f32 to vector<16x128xf32>
    %26 = arith.maximumf %24, %25 : vector<16x128xf32>
    %cst_27 = arith.constant 0.000000e+00 : f32
    %27 = vector.broadcast %cst_27 : f32 to vector<18x128xf32>
    %c0_28 = arith.constant 0 : index
    %c0_29 = arith.constant 0 : index
    %28 = vector.load %arg10[%c0_28, %c0_29] : memref<18x128xf32, #tpu.memory_space<vmem>>, vector<18x128xf32>
    tpu.vector_store %arg10[%c0_28, %c0_29], %27 {strides = array<i32>} : memref<18x128xf32, #tpu.memory_space<vmem>>, vector<18x128xf32>,
    %c1_30 = arith.constant 1 : index
    %c0_31 = arith.constant 0 : index
    %29 = vector.load %arg10[%c1_30, %c0_31] : memref<18x128xf32, #tpu.memory_space<vmem>>, vector<16x128xf32>
    tpu.vector_store %arg10[%c1_30, %c0_31], %26 {strides = array<i32>} : memref<18x128xf32, #tpu.memory_space<vmem>>, vector<16x128xf32>,
    %c0_32 = arith.constant 0 : index
    %c0_33 = arith.constant 0 : index
    %30 = vector.load %arg10[%c0_32, %c0_33] : memref<18x128xf32, #tpu.memory_space<vmem>>, vector<16x128xf32>
    %c0_34 = arith.constant 0 : index
    %c0_35 = arith.constant 0 : index
    %c0_36 = arith.constant 0 : index
    %31 = vector.load %arg5[%c0_34, %c0_35, %c0_36] : memref<3x128x128xf32, #tpu.memory_space<vmem>>, vector<1x128x128xf32>
    %32 = vector.shape_cast %31 : vector<1x128x128xf32> to vector<128x128xf32>
    %cst_37 = arith.constant dense<0.000000e+00> : vector<16x128xf32>
    %33 = tpu.matmul %30, %32, %cst_37 {dimension_numbers = #tpu.dot_dimension_numbers<[1], [0], [0], [1], [0, 0, 1, 1], [], []>} : vector<16x128xf32>, vector<128x128xf32>, vector<16x128xf32> -> vector<16x128xf32>
    %c1_38 = arith.constant 1 : index
    %c0_39 = arith.constant 0 : index
    %34 = vector.load %arg10[%c1_38, %c0_39] : memref<18x128xf32, #tpu.memory_space<vmem>>, vector<16x128xf32>
    %c1_40 = arith.constant 1 : index
    %c0_41 = arith.constant 0 : index
    %c0_42 = arith.constant 0 : index
    %35 = vector.load %arg5[%c1_40, %c0_41, %c0_42] : memref<3x128x128xf32, #tpu.memory_space<vmem>>, vector<1x128x128xf32>
    %36 = vector.shape_cast %35 : vector<1x128x128xf32> to vector<128x128xf32>
    %cst_43 = arith.constant dense<0.000000e+00> : vector<16x128xf32>
    %37 = tpu.matmul %34, %36, %cst_43 {dimension_numbers = #tpu.dot_dimension_numbers<[1], [0], [0], [1], [0, 0, 1, 1], [], []>} : vector<16x128xf32>, vector<128x128xf32>, vector<16x128xf32> -> vector<16x128xf32>
    %38 = arith.addf %33, %37 : vector<16x128xf32>
    %c2_44 = arith.constant 2 : index
    %c0_45 = arith.constant 0 : index
    %39 = vector.load %arg10[%c2_44, %c0_45] : memref<18x128xf32, #tpu.memory_space<vmem>>, vector<16x128xf32>
    %c2_46 = arith.constant 2 : index
    %c0_47 = arith.constant 0 : index
    %c0_48 = arith.constant 0 : index
    %40 = vector.load %arg5[%c2_46, %c0_47, %c0_48] : memref<3x128x128xf32, #tpu.memory_space<vmem>>, vector<1x128x128xf32>
    %41 = vector.shape_cast %40 : vector<1x128x128xf32> to vector<128x128xf32>
    %cst_49 = arith.constant dense<0.000000e+00> : vector<16x128xf32>
    %42 = tpu.matmul %39, %41, %cst_49 {dimension_numbers = #tpu.dot_dimension_numbers<[1], [0], [0], [1], [0, 0, 1, 1], [], []>} : vector<16x128xf32>, vector<128x128xf32>, vector<16x128xf32> -> vector<16x128xf32>
    %43 = arith.addf %38, %42 : vector<16x128xf32>
    %c0_50 = arith.constant 0 : index
    %c0_51 = arith.constant 0 : index
    %44 = vector.load %arg6[%c0_50, %c0_51] : memref<1x128xf32, #tpu.memory_space<vmem>>, vector<1x128xf32>
    %45 = vector.broadcast %44 : vector<1x128xf32> to vector<16x128xf32>
    %46 = arith.mulf %43, %45 : vector<16x128xf32>
    %c0_52 = arith.constant 0 : index
    %c0_53 = arith.constant 0 : index
    %47 = vector.load %arg7[%c0_52, %c0_53] : memref<1x128xf32, #tpu.memory_space<vmem>>, vector<1x128xf32>
    %48 = vector.broadcast %47 : vector<1x128xf32> to vector<16x128xf32>
    %49 = arith.addf %46, %48 : vector<16x128xf32>
    %cst_54 = arith.constant 0.000000e+00 : f32
    %50 = vector.broadcast %cst_54 : f32 to vector<16x128xf32>
    %51 = arith.maximumf %49, %50 : vector<16x128xf32>
    %c0_55 = arith.constant 0 : index
    %c0_56 = arith.constant 0 : index
    %c0_57 = arith.constant 0 : index
    %52 = vector.load %arg8[%c0_55, %c0_56, %c0_57] : memref<1x16x128xf32, #tpu.memory_space<vmem>>, vector<1x16x128xf32>
    %53 = vector.shape_cast %52 : vector<1x16x128xf32> to vector<16x128xf32>
    %54 = vector.shape_cast %51 : vector<16x128xf32> to vector<1x16x128xf32>
    tpu.vector_store %arg8[%c0_55, %c0_56, %c0_57], %54 {strides = array<i32>} : memref<1x16x128xf32, #tpu.memory_space<vmem>>, vector<1x16x128xf32>,
    return
  }
  func.func @transform_0(%arg0: i32) -> (i32, i32, i32) {
    %c0_i32 = arith.constant 0 : i32
    %c0_i32_0 = arith.constant 0 : i32
    %c0_i32_1 = arith.constant 0 : i32
    return %arg0, %c0_i32, %c0_i32_0 : i32, i32, i32
  }
  func.func @transform_1(%arg0: i32) -> (i32, i32, i32) {
    %c0_i32 = arith.constant 0 : i32
    %c0_i32_0 = arith.constant 0 : i32
    %c0_i32_1 = arith.constant 0 : i32
    %c0_i32_2 = arith.constant 0 : i32
    return %c0_i32, %c0_i32_0, %c0_i32_1 : i32, i32, i32
  }
  func.func @transform_2(%arg0: i32) -> (i32, i32) {
    %c0_i32 = arith.constant 0 : i32
    %c0_i32_0 = arith.constant 0 : i32
    %c0_i32_1 = arith.constant 0 : i32
    return %c0_i32, %c0_i32_0 : i32, i32
  }
  func.func @transform_3(%arg0: i32) -> (i32, i32) {
    %c0_i32 = arith.constant 0 : i32
    %c0_i32_0 = arith.constant 0 : i32
    %c0_i32_1 = arith.constant 0 : i32
    return %c0_i32, %c0_i32_0 : i32, i32
  }
  func.func @transform_4(%arg0: i32) -> (i32, i32, i32) {
    %c0_i32 = arith.constant 0 : i32
    %c0_i32_0 = arith.constant 0 : i32
    %c0_i32_1 = arith.constant 0 : i32
    %c0_i32_2 = arith.constant 0 : i32
    return %c0_i32, %c0_i32_0, %c0_i32_1 : i32, i32, i32
  }
  func.func @transform_5(%arg0: i32) -> (i32, i32) {
    %c0_i32 = arith.constant 0 : i32
    %c0_i32_0 = arith.constant 0 : i32
    %c0_i32_1 = arith.constant 0 : i32
    return %c0_i32, %c0_i32_0 : i32, i32
  }
  func.func @transform_6(%arg0: i32) -> (i32, i32) {
    %c0_i32 = arith.constant 0 : i32
    %c0_i32_0 = arith.constant 0 : i32
    %c0_i32_1 = arith.constant 0 : i32
    return %c0_i32, %c0_i32_0 : i32, i32
  }
  func.func @transform_7(%arg0: i32) -> (i32, i32, i32) {
    %c0_i32 = arith.constant 0 : i32
    %c0_i32_0 = arith.constant 0 : i32
    %c0_i32_1 = arith.constant 0 : i32
    return %arg0, %c0_i32, %c0_i32_0 : i32, i32, i32
  }
}

</mosaic_0001>

<llo_original>
// kernel: tile.23
$region0: #{tile.23}
  #allocation0 [shape = 's32[1]{0}', space=sflag, size = 0x4, scoped, tag = 'scoped memory for tile.23']
  %s0 = inlined_call_operand.vmem [shape: f32[8], index: 0, kind: input, shape index: {}]
  %s1 = inlined_call_operand.vmem [shape: f32[16,8], index: 1, kind: output, shape index: {}]
  // Predicated region
  $region2: #{tile.23} parent=0 // pred_check
    _
  $region3: #{tile.23} parent=0 // pred_check_branch
    %3 = sbr.rel (0) target = $region5
  $region4: #{tile.23} parent=0 // pred_region
    _
  $region5: #{tile.23} parent=0 // pred_fallthru
    _
  %v4 = vld [vmem:[%s0] ss:$0 sm:$0xff]
  %5 = vst [vmem:[%s1] sm:$0xff] %v4
  %s6 = scalar_lea.vmem %s1, 8
  %7 = vst [vmem:[%s6] sm:$0xff] %v4

// kernel: tile.24
$region0: #{tile.24}
  %s0 = inlined_call_operand.vmem [shape: f32[16,8], index: 0, kind: input, shape index: {}]
  %s1 = inlined_call_operand.vmem [shape: f32[1,128], index: 1, kind: output, shape index: {}]
  $region1: #{tile.24} parent=0
    #allocation0 [shape = 'u8[4096]{0}', space=vmem, size = 0x1000, scoped, tag = 'scoped mem for output reshape']
    %v2 = vld [vmem:[%s0] sm:$0x1]
    %vm3 = vcmask 64512
    %4 = vst.msk [vmem:[#allocation0] sm:$0x1] %vm3, %v2
    %s5 = scalar_lea.vmem %s0, 15
    %v6 = vld [vmem:[%s5] sm:$0x1]
    %7 = vrot.lane.b32.xlu0 %v6, 120
    %v8 = vpop.permute.xlu0 %7
    %vm9 = vcmask 1048512
    %10 = vst.msk [vmem:[#allocation0] sm:$0x1] %vm9, %v8
    %s11 = scalar_lea.vmem %s0, 14
    %v12 = vld [vmem:[%s11] sm:$0x1]
    %13 = vrot.lane.b32.xlu0 %v12, 112
    %v14 = vpop.permute.xlu0 %13
    %vm15 = vcmask 982912
    %16 = vst.msk [vmem:[#allocation0] sm:$0x1] %vm15, %v14
    %s17 = scalar_lea.vmem %s0, 13
    %v18 = vld [vmem:[%s17] sm:$0x1]
    %19 = vrot.lane.b32.xlu0 %v18, 104
    %v20 = vpop.permute.xlu0 %19
    %vm21 = vcmask 917312
    %22 = vst.msk [vmem:[#allocation0] sm:$0x1] %vm21, %v20
    %s23 = scalar_lea.vmem %s0, 12
    %v24 = vld [vmem:[%s23] sm:$0x1]
    %25 = vrot.lane.b32.xlu0 %v24, 96
    %v26 = vpop.permute.xlu0 %25
    %vm27 = vcmask 851712
    %28 = vst.msk [vmem:[#allocation0] sm:$0x1] %vm27, %v26
    %s29 = scalar_lea.vmem %s0, 11
    %v30 = vld [vmem:[%s29] sm:$0x1]
    %31 = vrot.lane.b32.xlu0 %v30, 88
    %v32 = vpop.permute.xlu0 %31
    %vm33 = vcmask 786112
    %34 = vst.msk [vmem:[#allocation0] sm:$0x1] %vm33, %v32
    %s35 = scalar_lea.vmem %s0, 10
    %v36 = vld [vmem:[%s35] sm:$0x1]
    %37 = vrot.lane.b32.xlu0 %v36, 80
    %v38 = vpop.permute.xlu0 %37
    %vm39 = vcmask 720512
    %40 = vst.msk [vmem:[#allocation0] sm:$0x1] %vm39, %v38
    %s41 = scalar_lea.vmem %s0, 9
    %v42 = vld [vmem:[%s41] sm:$0x1]
    %43 = vrot.lane.b32.xlu0 %v42, 72
    %v44 = vpop.permute.xlu0 %43
    %vm45 = vcmask 654912
    %46 = vst.msk [vmem:[#allocation0] sm:$0x1] %vm45, %v44
    %s47 = scalar_lea.vmem %s0, 8
    %v48 = vld [vmem:[%s47] sm:$0x1]
    %49 = vrot.lane.b32.xlu0 %v48, 64
    %v50 = vpop.permute.xlu0 %49
    %vm51 = vcmask 589312
    %52 = vst.msk [vmem:[#allocation0] sm:$0x1] %vm51, %v50
    %s53 = scalar_lea.vmem %s0, 7
    %v54 = vld [vmem:[%s53] sm:$0x1]
    %55 = vrot.lane.b32.xlu0 %v54, 56
    %v56 = vpop.permute.xlu0 %55
    %vm57 = vcmask 523712
    %58 = vst.msk [vmem:[#allocation0] sm:$0x1] %vm57, %v56
    %s59 = scalar_lea.vmem %s0, 6
    %v60 = vld [vmem:[%s59] sm:$0x1]
    %61 = vrot.lane.b32.xlu0 %v60, 48
    %v62 = vpop.permute.xlu0 %61
    %vm63 = vcmask 458112
    %64 = vst.msk [vmem:[#allocation0] sm:$0x1] %vm63, %v62
    %s65 = scalar_lea.vmem %s0, 5
    %v66 = vld [vmem:[%s65] sm:$0x1]
    %67 = vrot.lane.b32.xlu0 %v66, 40
    %v68 = vpop.permute.xlu0 %67
    %vm69 = vcmask 392512
    %70 = vst.msk [vmem:[#allocation0] sm:$0x1] %vm69, %v68
    %s71 = scalar_lea.vmem %s0, 4
    %v72 = vld [vmem:[%s71] sm:$0x1]
    %73 = vrot.lane.b32.xlu0 %v72, 32
    %v74 = vpop.permute.xlu0 %73
    %vm75 = vcmask 326912
    %76 = vst.msk [vmem:[#allocation0] sm:$0x1] %vm75, %v74
    %s77 = scalar_lea.vmem %s0, 3
    %v78 = vld [vmem:[%s77] sm:$0x1]
    %79 = vrot.lane.b32.xlu0 %v78, 24
    %v80 = vpop.permute.xlu0 %79
    %vm81 = vcmask 261312
    %82 = vst.msk [vmem:[#allocation0] sm:$0x1] %vm81, %v80
    %s83 = scalar_lea.vmem %s0, 2
    %v84 = vld [vmem:[%s83] sm:$0x1]
    %85 = vrot.lane.b32.xlu0 %v84, 16
    %v86 = vpop.permute.xlu0 %85
    %vm87 = vcmask 195712
    %88 = vst.msk [vmem:[#allocation0] sm:$0x1] %vm87, %v86
    %s89 = scalar_lea.vmem %s0, 1
    %v90 = vld [vmem:[%s89] sm:$0x1]
    %91 = vrot.lane.b32.xlu0 %v90, 8
    %v92 = vpop.permute.xlu0 %91
    %vm93 = vcmask 130112
    %94 = vst.msk [vmem:[#allocation0] sm:$0x1] %vm93, %v92
    %s96 = ssub.s32 2, 1
    %v97 = vld [vmem:[#allocation0] sm:%s96]
    %s99 = ssub.s32 2, 1
    %100 = vst [vmem:[%s1] sm:%s99] %v97

// kernel: conv_block_forward.1
$region0: #{conv_block_forward.1}
  #allocation0 [shape = 'u32[]', space=smem, size = 0x4, offset = 0x4, fixed_abs, tag = 'smem constant byte address 0x4 - core index']
  #allocation1 [shape = 'u32[72,128]{1,0:T(1,128)}', space=vmem, size = 0x9000, scoped, tag = 'internal scratch']
  #allocation2 [shape = 'f32[18,64]{1,0:T(8,128)}', space=vmem, size = 0x3000, scoped, tag = 'scratch operand']
  #allocation3 [shape = 'f32[18,128]{1,0:T(8,128)}', space=vmem, size = 0x3000, scoped, tag = 'scratch operand']
  %s0 = inlined_call_operand.vmem [shape: f32[2,16,64], index: 0, kind: input, shape index: {}]
  %s1 = inlined_call_operand.vmem [shape: f32[3,64,128], index: 1, kind: input, shape index: {}]
  %s2 = inlined_call_operand.vmem [shape: f32[1,128], index: 2, kind: input, shape index: {}]
  %s3 = inlined_call_operand.vmem [shape: f32[1,128], index: 3, kind: input, shape index: {}]
  %s4 = inlined_call_operand.vmem [shape: f32[3,128,128], index: 4, kind: input, shape index: {}]
  %s5 = inlined_call_operand.vmem [shape: f32[1,128], index: 5, kind: input, shape index: {}]
  %s6 = inlined_call_operand.vmem [shape: f32[1,128], index: 6, kind: input, shape index: {}]
  %s7 = inlined_call_operand.vmem [shape: f32[2,16,128], index: 7, kind: output, shape index: {}]
  %s8 = sld [smem:[#allocation0]]
  $region61: #{conv_block_forward.1} parent=0
    _
  %s10 = ssub.s32 1, %s8
  %s11 = scalar_select 0, %s10, %s8
  loop: start=0, step=1, limit=4
  $region2: #{conv_block_forward.1} parent=0 // loop_pre_header
    _
  $region3: #{conv_block_forward.1} parent=0 // loop_header
    %s13 = sphi 0, %s17
    %p14 = scmp.ge.s32.totalorder %s13, 4
    %s23 = sphi 0, %s25
    %s26 = sphi 0, %s23
    %s27 = sphi 0, %s26
    %s43 = sphi 0, %s27
    %s47 = sphi 0, %s47
    %s49 = sphi 0, %s47
    %s50 = sphi 0, %s49
    %s64 = sphi 0, %s50
    %s68 = sphi 0, %s68
    %s70 = sphi 0, %s68
    %s71 = sphi 0, %s70
    %s85 = sphi 0, %s71
    %s89 = sphi 0, %s89
    %s91 = sphi 0, %s89
    %s92 = sphi 0, %s91
    %s106 = sphi 0, %s92
    %s110 = sphi 0, %s110
    %s112 = sphi 0, %s110
    %s113 = sphi 0, %s112
    %s127 = sphi 0, %s113
    %s131 = sphi 0, %s131
    %s133 = sphi 0, %s131
    %s134 = sphi 0, %s133
    %s148 = sphi 0, %s134
    %s152 = sphi 0, %s152
    %s154 = sphi 0, %s152
    %s155 = sphi 0, %s154
    %s169 = sphi 0, %s155
    %s175 = sphi 0, %s177
    %s178 = sphi 0, %s175
    %s179 = sphi 0, %s178
    %s195 = sphi 0, %s179
  $region4: #{conv_block_forward.1} parent=0 // loop_header_branch
    %16 = sbr.rel (%p14) target = $region8
  $region5: #{conv_block_forward.1} parent=0 // loop_body
    %s18 = ssub.s32 %s13, 1
    %s19 = ssub.s32 %s13, 2
    %s20 = sadd.s32 %s13, 1
    %s21 = ssub.s32 %s13, %s20
    %p22 = scmp.eq.s32.totalorder %s21, 0
    %s24 = sadd.s32 %s23, 1
    %s25 = scalar_select %p22, %s23, %s24
    %p28 = pneg %p22
    %p29 = scmp.eq.s32.totalorder %s13, 1
    %p30 = por %p28, %p29
    %p31 = scmp.ne.s32.totalorder %s23, %s26
    %p32 = scmp.eq.s32.totalorder %s13, 0
    %p33 = por %p31, %p32
    %p34 = scmp.ne.s32.totalorder %s23, %s26
    %p35 = scmp.eq.s32.totalorder %s18, 1
    %p36 = por %p34, %p35
    %p37 = scmp.ne.s32.totalorder %s26, %s27
    %p38 = scmp.eq.s32.totalorder %s18, 0
    %p39 = por %p37, %p38
    %p40 = scmp.ne.s32.totalorder %s26, %s27
    %p41 = scmp.eq.s32.totalorder %s19, 1
    %p42 = por %p40, %p41
    %p44 = scmp.ne.s32.totalorder %s27, %s43
    %p45 = scmp.eq.s32.totalorder %s19, 0
    %p46 = por %p44, %p45
    %s48 = sadd.s32 %s47, 1
    %p51 = scmp.eq.s32.totalorder %s13, 1
    %p52 = scmp.ne.s32.totalorder %s47, %s49
    %p53 = scmp.eq.s32.totalorder %s13, 0
    %p54 = por %p52, %p53
    %p55 = scmp.ne.s32.totalorder %s47, %s49
    %p56 = scmp.eq.s32.totalorder %s18, 1
    %p57 = por %p55, %p56
    %p58 = scmp.ne.s32.totalorder %s49, %s50
    %p59 = scmp.eq.s32.totalorder %s18, 0
    %p60 = por %p58, %p59
    %p61 = scmp.ne.s32.totalorder %s49, %s50
    %p62 = scmp.eq.s32.totalorder %s19, 1
    %p63 = por %p61, %p62
    %p65 = scmp.ne.s32.totalorder %s50, %s64
    %p66 = scmp.eq.s32.totalorder %s19, 0
    %p67 = por %p65, %p66
    %s69 = sadd.s32 %s68, 1
    %p72 = scmp.eq.s32.totalorder %s13, 1
    %p73 = scmp.ne.s32.totalorder %s68, %s70
    %p74 = scmp.eq.s32.totalorder %s13, 0
    %p75 = por %p73, %p74
    %p76 = scmp.ne.s32.totalorder %s68, %s70
    %p77 = scmp.eq.s32.totalorder %s18, 1
    %p78 = por %p76, %p77
    %p79 = scmp.ne.s32.totalorder %s70, %s71
    %p80 = scmp.eq.s32.totalorder %s18, 0
    %p81 = por %p79, %p80
    %p82 = scmp.ne.s32.totalorder %s70, %s71
    %p83 = scmp.eq.s32.totalorder %s19, 1
    %p84 = por %p82, %p83
    %p86 = scmp.ne.s32.totalorder %s71, %s85
    %p87 = scmp.eq.s32.totalorder %s19, 0
    %p88 = por %p86, %p87
    %s90 = sadd.s32 %s89, 1
    %p93 = scmp.eq.s32.totalorder %s13, 1
    %p94 = scmp.ne.s32.totalorder %s89, %s91
    %p95 = scmp.eq.s32.totalorder %s13, 0
    %p96 = por %p94, %p95
    %p97 = scmp.ne.s32.totalorder %s89, %s91
    %p98 = scmp.eq.s32.totalorder %s18, 1
    %p99 = por %p97, %p98
    %p100 = scmp.ne.s32.totalorder %s91, %s92
    %p101 = scmp.eq.s32.totalorder %s18, 0
    %p102 = por %p100, %p101
    %p103 = scmp.ne.s32.totalorder %s91, %s92
    %p104 = scmp.eq.s32.totalorder %s19, 1
    %p105 = por %p103, %p104
    %p107 = scmp.ne.s32.totalorder %s92, %s106
    %p108 = scmp.eq.s32.totalorder %s19, 0
    %p109 = por %p107, %p108
    %s111 = sadd.s32 %s110, 1
    %p114 = scmp.eq.s32.totalorder %s13, 1
    %p115 = scmp.ne.s32.totalorder %s110, %s112
    %p116 = scmp.eq.s32.totalorder %s13, 0
    %p117 = por %p115, %p116
    %p118 = scmp.ne.s32.totalorder %s110, %s112
    %p119 = scmp.eq.s32.totalorder %s18, 1
    %p120 = por %p118, %p119
    %p121 = scmp.ne.s32.totalorder %s112, %s113
    %p122 = scmp.eq.s32.totalorder %s18, 0
    %p123 = por %p121, %p122
    %p124 = scmp.ne.s32.totalorder %s112, %s113
    %p125 = scmp.eq.s32.totalorder %s19, 1
    %p126 = por %p124, %p125
    %p128 = scmp.ne.s32.totalorder %s113, %s127
    %p129 = scmp.eq.s32.totalorder %s19, 0
    %p130 = por %p128, %p129
    %s132 = sadd.s32 %s131, 1
    %p135 = scmp.eq.s32.totalorder %s13, 1
    %p136 = scmp.ne.s32.totalorder %s131, %s133
    %p137 = scmp.eq.s32.totalorder %s13, 0
    %p138 = por %p136, %p137
    %p139 = scmp.ne.s32.totalorder %s131, %s133
    %p140 = scmp.eq.s32.totalorder %s18, 1
    %p141 = por %p139, %p140
    %p142 = scmp.ne.s32.totalorder %s133, %s134
    %p143 = scmp.eq.s32.totalorder %s18, 0
    %p144 = por %p142, %p143
    %p145 = scmp.ne.s32.totalorder %s133, %s134
    %p146 = scmp.eq.s32.totalorder %s19, 1
    %p147 = por %p145, %p146
    %p149 = scmp.ne.s32.totalorder %s134, %s148
    %p150 = scmp.eq.s32.totalorder %s19, 0
    %p151 = por %p149, %p150
    %s153 = sadd.s32 %s152, 1
    %p156 = scmp.eq.s32.totalorder %s13, 1
    %p157 = scmp.ne.s32.totalorder %s152, %s154
    %p158 = scmp.eq.s32.totalorder %s13, 0
    %p159 = por %p157, %p158
    %p160 = scmp.ne.s32.totalorder %s152, %s154
    %p161 = scmp.eq.s32.totalorder %s18, 1
    %p162 = por %p160, %p161
    %p163 = scmp.ne.s32.totalorder %s154, %s155
    %p164 = scmp.eq.s32.totalorder %s18, 0
    %p165 = por %p163, %p164
    %p166 = scmp.ne.s32.totalorder %s154, %s155
    %p167 = scmp.eq.s32.totalorder %s19, 1
    %p168 = por %p166, %p167
    %p170 = scmp.ne.s32.totalorder %s155, %s169
    %p171 = scmp.eq.s32.totalorder %s19, 0
    %p172 = por %p170, %p171
    %s173 = ssub.s32 %s13, %s20
    %p174 = scmp.eq.s32.totalorder %s173, 0
    %s176 = sadd.s32 %s175, 1
    %s177 = scalar_select %p174, %s175, %s176
    %p180 = pneg %p174
    %p181 = scmp.eq.s32.totalorder %s13, 1
    %p182 = por %p180, %p181
    %p183 = scmp.ne.s32.totalorder %s175, %s178
    %p184 = scmp.eq.s32.totalorder %s13, 0
    %p185 = por %p183, %p184
    %p186 = scmp.ne.s32.totalorder %s175, %s178
    %p187 = scmp.eq.s32.totalorder %s18, 1
    %p188 = por %p186, %p187
    %p189 = scmp.ne.s32.totalorder %s178, %s179
    %p190 = scmp.eq.s32.totalorder %s18, 0
    %p191 = por %p189, %p190
    %p192 = scmp.ne.s32.totalorder %s178, %s179
    %p193 = scmp.eq.s32.totalorder %s19, 1
    %p194 = por %p192, %p193
    %p196 = scmp.ne.s32.totalorder %s179, %s195
    %p197 = scmp.eq.s32.totalorder %s19, 0
    %p198 = por %p196, %p197
    %p199 = scmp.le.s32.totalorder 1, %s13
    %p200 = scmp.lt.s32.totalorder %s13, 3
    %p201 = pnand %p199, %p200
    %p202 = pneg %p201
    // Predicated region
    $region9: #{conv_block_forward.1} parent=5 // pred_check
      _
    $region10: #{conv_block_forward.1} parent=5 // pred_check_branch
      %204 = sbr.rel (%p201) target = $region12
    $region11: #{conv_block_forward.1} parent=5 // pred_region
      %s205 = ssub.s32 %s13, 1
      // Predicated region
      $region13: #{conv_block_forward.1} parent=11 // pred_check
        %p206 = pneg %p60
      $region14: #{conv_block_forward.1} parent=11 // pred_check_branch
        %208 = sbr.rel (%p206) target = $region16
      $region15: #{conv_block_forward.1} parent=11 // pred_region
        _
      $region16: #{conv_block_forward.1} parent=11 // pred_fallthru
        _
      // Predicated region
      $region17: #{conv_block_forward.1} parent=11 // pred_check
        %p209 = pneg %p81
      $region18: #{conv_block_forward.1} parent=11 // pred_check_branch
        %211 = sbr.rel (%p209) target = $region20
      $region19: #{conv_block_forward.1} parent=11 // pred_region
        _
      $region20: #{conv_block_forward.1} parent=11 // pred_fallthru
        _
      // Predicated region
      $region21: #{conv_block_forward.1} parent=11 // pred_check
        %p212 = pneg %p102
      $region22: #{conv_block_forward.1} parent=11 // pred_check_branch
        %214 = sbr.rel (%p212) target = $region24
      $region23: #{conv_block_forward.1} parent=11 // pred_region
        _
      $region24: #{conv_block_forward.1} parent=11 // pred_fallthru
        _
      // Predicated region
      $region25: #{conv_block_forward.1} parent=11 // pred_check
        %p215 = pneg %p123
      $region26: #{conv_block_forward.1} parent=11 // pred_check_branch
        %217 = sbr.rel (%p215) target = $region28
      $region27: #{conv_block_forward.1} parent=11 // pred_region
        _
      $region28: #{conv_block_forward.1} parent=11 // pred_fallthru
        _
      // Predicated region
      $region29: #{conv_block_forward.1} parent=11 // pred_check
        %p218 = pneg %p144
      $region30: #{conv_block_forward.1} parent=11 // pred_check_branch
        %220 = sbr.rel (%p218) target = $region32
      $region31: #{conv_block_forward.1} parent=11 // pred_region
        _
      $region32: #{conv_block_forward.1} parent=11 // pred_fallthru
        _
      // Predicated region
      $region33: #{conv_block_forward.1} parent=11 // pred_check
        %p221 = pneg %p165
      $region34: #{conv_block_forward.1} parent=11 // pred_check_branch
        %223 = sbr.rel (%p221) target = $region36
      $region35: #{conv_block_forward.1} parent=11 // pred_region
        _
      $region36: #{conv_block_forward.1} parent=11 // pred_fallthru
        _
    $region12: #{conv_block_forward.1} parent=5 // pred_fallthru
      _
    %p224 = scmp.lt.s32.totalorder %s13, 2
    // Predicated region
    $region37: #{conv_block_forward.1} parent=5 // pred_check
      %p225 = pneg %p224
    $region38: #{conv_block_forward.1} parent=5 // pred_check_branch
      %227 = sbr.rel (%p225) target = $region40
    $region39: #{conv_block_forward.1} parent=5 // pred_region
      // Predicated region
      $region41: #{conv_block_forward.1} parent=39 // pred_check
        %p228 = pneg %p33
      $region42: #{conv_block_forward.1} parent=39 // pred_check_branch
        %230 = sbr.rel (%p228) target = $region44
      $region43: #{conv_block_forward.1} parent=39 // pred_region
        %p231 = scmp.lt.s32.totalorder %s13, 1
        %s232 = scalar_select %p231, %s13, 1
        %s233 = smul.addr %s232, 2
        %s234 = smul.addr %s233, 8
        %s235 = scalar_lea.vmem %s0, %s234
      $region44: #{conv_block_forward.1} parent=39 // pred_fallthru
        _
    $region40: #{conv_block_forward.1} parent=5 // pred_fallthru
      _
    %p236 = scmp.le.s32.totalorder 1, %s13
    %p237 = scmp.lt.s32.totalorder %s13, 3
    %p238 = pnand %p236, %p237
    %p239 = pneg %p238
    // Predicated region
    $region45: #{conv_block_forward.1} parent=5 // pred_check
      _
    $region46: #{conv_block_forward.1} parent=5 // pred_check_branch
      %241 = sbr.rel (%p238) target = $region48
    $region47: #{conv_block_forward.1} parent=5 // pred_region
      %s242 = ssub.s32 %s13, 1
      %p243 = scmp.lt.s32.totalorder %s18, 1
      %s244 = scalar_select %p243, %s18, 1
      %s245 = smul.addr %s244, 2
      %s246 = smul.addr %s245, 8
      %s247 = scalar_lea.vmem %s0, %s246
      %p248 = pneg %p39
      %p249 = pneg %p36
      %p250 = pneg %p60
      %p251 = pneg %p57
      %p252 = pneg %p81
      %p253 = pneg %p78
      %p254 = pneg %p102
      %p255 = pneg %p99
      %p256 = pneg %p123
      %p257 = pneg %p120
      %p258 = pneg %p144
      %p259 = pneg %p141
      %p260 = pneg %p165
      %p261 = pneg %p162
      %p262 = pneg %p191
      %p263 = pneg %p188
      %p264 = scmp.lt.s32.totalorder %s18, 1
      %s265 = scalar_select %p264, %s18, 1
      %s266 = smul.addr %s265, 2
      %s267 = smul.addr %s266, 8
      %s268 = scalar_lea.vmem %s7, %s267
      %p269 = scmp.lt.s32.totalorder %s18, 1
      %s270 = scalar_select %p269, %s18, 1
      %s271 = smul.addr %s270, 2
      %s272 = smul.addr %s271, 8
      %s273 = scalar_lea.vmem %s0, %s272
      %p274 = scmp.lt.s32.totalorder %s18, 1
      %s275 = scalar_select %p274, %s18, 1
      %s276 = smul.addr %s275, 2
      %s277 = smul.addr %s276, 8
      %s278 = scalar_lea.vmem %s7, %s277
      %vm279 = vcmask 523264
      %280 = vst.msk [vmem:[#allocation2] sm:$0xff] %vm279, 0.0
      %281 = vst.msk [vmem:[#allocation2 + $0x8] sm:$0xff] %vm279, 0.0
      %vm282 = vcmask 517120
      %283 = vst.msk [vmem:[#allocation2 + $0x10] sm:$0x3] %vm282, 0.0
      %v284 = vld [vmem:[%s273] sm:$0xff]
      %v285 = vld [vmem:[%s273 + $0x8] sm:$0xff]
      %286 = vst.msk [vmem:[#allocation2 + $0x1] sm:$0xff] %vm279, %v284
      %287 = vst.msk [vmem:[#allocation2 + $0x9] sm:$0xff] %vm279, %v285
      %v288 = vld [vmem:[#allocation2] sm:$0xff]
      %v289 = vld [vmem:[#allocation2 + $0x8] sm:$0xff]
      %v290 = vld [vmem:[%s1] sm:$0xff]
      %v291 = vld [vmem:[%s1 + $0x8] sm:$0xff]
      %v292 = vld [vmem:[%s1 + $0x10] sm:$0xff]
      %v293 = vld [vmem:[%s1 + $0x18] sm:$0xff]
      %v294 = vld [vmem:[%s1 + $0x20] sm:$0xff]
      %v295 = vld [vmem:[%s1 + $0x28] sm:$0xff]
      %v296 = vld [vmem:[%s1 + $0x30] sm:$0xff]
      %v297 = vld [vmem:[%s1 + $0x38] sm:$0xff]
      %v298 = vld [vmem:[#allocation2 + $0x1] sm:$0xff]
      %v299 = vld [vmem:[#allocation2 + $0x9] sm:$0xff]
      %s300 = scalar_lea.vmem %s1, 64
      %v301 = vld [vmem:[%s300] sm:$0xff]
      %v302 = vld [vmem:[%s300 + $0x8] sm:$0xff]
      %v303 = vld [vmem:[%s300 + $0x10] sm:$0xff]
      %v304 = vld [vmem:[%s300 + $0x18] sm:$0xff]
      %v305 = vld [vmem:[%s300 + $0x20] sm:$0xff]
      %v306 = vld [vmem:[%s300 + $0x28] sm:$0xff]
      %v307 = vld [vmem:[%s300 + $0x30] sm:$0xff]
      %v308 = vld [vmem:[%s300 + $0x38] sm:$0xff]
      %v310 = vsel %vm279, %v298, 0
      %v313 = vsel %vm279, %v299, 0
      %315 = vmatpush.msra.mxu0 0.0
      %316 = vmatpush.msra.mxu0 0.0
      %317 = vmatpush.msra.mxu0 0.0
      %318 = vmatpush.msra.mxu0 0.0
      %319 = vmatpush.msra.mxu0 0.0
      %320 = vmatpush.msra.mxu0 0.0
      %321 = vmatpush.msra.mxu0 0.0
      %322 = vmatpush.msra.mxu0 0.0
      %323 = vmatpush.msra.mxu0 %v308
      %324 = vmatpush.msra.mxu0 %v307
      %325 = vmatpush.msra.mxu0 %v306
      %326 = vmatpush.msra.mxu0 %v305
      %327 = vmatpush.msra.mxu0 %v304
      %328 = vmatpush.msra.mxu0 %v303
      %329 = vmatpush.msra.mxu0 %v302
      %330 = vmatpush.msra.mxu0 %v301
      %331 = vmatmul.f32.gmra.mxu0 %v310
      %v332 = vpop.f32.mrf.mxu0
      %v333 = vadd.f32 0.0, %v332
      %334 = vmatmul.f32.gmra.mxu0 %v313
      %v335 = vpop.f32.mrf.mxu0
      %v336 = vadd.f32 0.0, %v335
      %337 = vdwg.mxu0
      %v339 = vsel %vm279, %v288, 0
      %v342 = vsel %vm279, %v289, 0
      %344 = vmatpush.msra.mxu0 0.0
      %345 = vmatpush.msra.mxu0 0.0
      %346 = vmatpush.msra.mxu0 0.0
      %347 = vmatpush.msra.mxu0 0.0
      %348 = vmatpush.msra.mxu0 0.0
      %349 = vmatpush.msra.mxu0 0.0
      %350 = vmatpush.msra.mxu0 0.0
      %351 = vmatpush.msra.mxu0 0.0
      %352 = vmatpush.msra.mxu0 %v297
      %353 = vmatpush.msra.mxu0 %v296
      %354 = vmatpush.msra.mxu0 %v295
      %355 = vmatpush.msra.mxu0 %v294
      %356 = vmatpush.msra.mxu0 %v293
      %357 = vmatpush.msra.mxu0 %v292
      %358 = vmatpush.msra.mxu0 %v291
      %359 = vmatpush.msra.mxu0 %v290
      %360 = vmatmul.f32.gmra.mxu0 %v339
      %v361 = vpop.f32.mrf.mxu0
      %v362 = vadd.f32 %v333, %v361
      %363 = vmatmul.f32.gmra.mxu0 %v342
      %v364 = vpop.f32.mrf.mxu0
      %v365 = vadd.f32 %v336, %v364
      %366 = vdwg.mxu0
      %v367 = vld [vmem:[#allocation2 + $0x2] sm:$0xff]
      %v368 = vld [vmem:[#allocation2 + $0xa] sm:$0xff]
      %s369 = scalar_lea.vmem %s1, 128
      %v370 = vld [vmem:[%s369] sm:$0xff]
      %v371 = vld [vmem:[%s369 + $0x8] sm:$0xff]
      %v372 = vld [vmem:[%s369 + $0x10] sm:$0xff]
      %v373 = vld [vmem:[%s369 + $0x18] sm:$0xff]
      %v374 = vld [vmem:[%s369 + $0x20] sm:$0xff]
      %v375 = vld [vmem:[%s369 + $0x28] sm:$0xff]
      %v376 = vld [vmem:[%s369 + $0x30] sm:$0xff]
      %v377 = vld [vmem:[%s369 + $0x38] sm:$0xff]
      %v379 = vsel %vm279, %v367, 0
      %v382 = vsel %vm279, %v368, 0
      %384 = vmatpush.msra.mxu0 0.0
      %385 = vmatpush.msra.mxu0 0.0
      %386 = vmatpush.msra.mxu0 0.0
      %387 = vmatpush.msra.mxu0 0.0
      %388 = vmatpush.msra.mxu0 0.0
      %389 = vmatpush.msra.mxu0 0.0
      %390 = vmatpush.msra.mxu0 0.0
      %391 = vmatpush.msra.mxu0 0.0
      %392 = vmatpush.msra.mxu0 %v377
      %393 = vmatpush.msra.mxu0 %v376
      %394 = vmatpush.msra.mxu0 %v375
      %395 = vmatpush.msra.mxu0 %v374
      %396 = vmatpush.msra.mxu0 %v373
      %397 = vmatpush.msra.mxu0 %v372
      %398 = vmatpush.msra.mxu0 %v371
      %399 = vmatpush.msra.mxu0 %v370
      %400 = vmatmul.f32.gmra.mxu0 %v379
      %v401 = vpop.f32.mrf.mxu0
      %v402 = vadd.f32 0.0, %v401
      %403 = vmatmul.f32.gmra.mxu0 %v382
      %v404 = vpop.f32.mrf.mxu0
      %v405 = vadd.f32 0.0, %v404
      %406 = vdwg.mxu0
      %v407 = vadd.f32 %v362, %v402
      %v408 = vadd.f32 %v365, %v405
      %v409 = vld [vmem:[%s2] sm:$0x1]
      %v411 = vperm.slane %v409, 0
      %v413 = vmul.f32 %v407, %v411
      %v414 = vmul.f32 %v408, %v411
      %v415 = vld [vmem:[%s3] sm:$0x1]
      %v417 = vperm.slane %v415, 0
      %v419 = vadd.f32 %v413, %v417
      %v420 = vadd.f32 %v414, %v417
      %v421 = vmax.f32 %v419, 0.0
      %v422 = vmax.f32 %v420, 0.0
      %423 = vst [vmem:[#allocation3] sm:$0xff] 0.0
      %424 = vst [vmem:[#allocation3 + $0x8] sm:$0xff] 0.0
      %425 = vst [vmem:[#allocation3 + $0x10] sm:$0x3] 0.0
      %426 = vst [vmem:[#allocation3 + $0x1] sm:$0xff] %v421
      %427 = vst [vmem:[#allocation3 + $0x9] sm:$0xff] %v422
      %v428 = vld [vmem:[#allocation3] sm:$0xff]
      %v429 = vld [vmem:[#allocation3 + $0x8] sm:$0xff]
      %v430 = vld [vmem:[%s4] sm:$0xff]
      %v431 = vld [vmem:[%s4 + $0x8] sm:$0xff]
      %v432 = vld [vmem:[%s4 + $0x10] sm:$0xff]
      %v433 = vld [vmem:[%s4 + $0x18] sm:$0xff]
      %v434 = vld [vmem:[%s4 + $0x20] sm:$0xff]
      %v435 = vld [vmem:[%s4 + $0x28] sm:$0xff]
      %v436 = vld [vmem:[%s4 + $0x30] sm:$0xff]
      %v437 = vld [vmem:[%s4 + $0x38] sm:$0xff]
      %v438 = vld [vmem:[%s4 + $0x40] sm:$0xff]
      %v439 = vld [vmem:[%s4 + $0x48] sm:$0xff]
      %v440 = vld [vmem:[%s4 + $0x50] sm:$0xff]
      %v441 = vld [vmem:[%s4 + $0x58] sm:$0xff]
      %v442 = vld [vmem:[%s4 + $0x60] sm:$0xff]
      %v443 = vld [vmem:[%s4 + $0x68] sm:$0xff]
      %v444 = vld [vmem:[%s4 + $0x70] sm:$0xff]
      %v445 = vld [vmem:[%s4 + $0x78] sm:$0xff]
      %v446 = vld [vmem:[#allocation3 + $0x1] sm:$0xff]
      %v447 = vld [vmem:[#allocation3 + $0x9] sm:$0xff]
      %s448 = scalar_lea.vmem %s4, 128
      %v449 = vld [vmem:[%s448] sm:$0xff]
      %v450 = vld [vmem:[%s448 + $0x8] sm:$0xff]
      %v451 = vld [vmem:[%s448 + $0x10] sm:$0xff]
      %v452 = vld [vmem:[%s448 + $0x18] sm:$0xff]
      %v453 = vld [vmem:[%s448 + $0x20] sm:$0xff]
      %v454 = vld [vmem:[%s448 + $0x28] sm:$0xff]
      %v455 = vld [vmem:[%s448 + $0x30] sm:$0xff]
      %v456 = vld [vmem:[%s448 + $0x38] sm:$0xff]
      %v457 = vld [vmem:[%s448 + $0x40] sm:$0xff]
      %v458 = vld [vmem:[%s448 + $0x48] sm:$0xff]
      %v459 = vld [vmem:[%s448 + $0x50] sm:$0xff]
      %v460 = vld [vmem:[%s448 + $0x58] sm:$0xff]
      %v461 = vld [vmem:[%s448 + $0x60] sm:$0xff]
      %v462 = vld [vmem:[%s448 + $0x68] sm:$0xff]
      %v463 = vld [vmem:[%s448 + $0x70] sm:$0xff]
      %v464 = vld [vmem:[%s448 + $0x78] sm:$0xff]
      %465 = vmatpush.msra.mxu0 %v464
      %466 = vmatpush.msra.mxu0 %v463
      %467 = vmatpush.msra.mxu0 %v462
      %468 = vmatpush.msra.mxu0 %v461
      %469 = vmatpush.msra.mxu0 %v460
      %470 = vmatpush.msra.mxu0 %v459
      %471 = vmatpush.msra.mxu0 %v458
      %472 = vmatpush.msra.mxu0 %v457
      %473 = vmatpush.msra.mxu0 %v456
      %474 = vmatpush.msra.mxu0 %v455
      %475 = vmatpush.msra.mxu0 %v454
      %476 = vmatpush.msra.mxu0 %v453
      %477 = vmatpush.msra.mxu0 %v452
      %478 = vmatpush.msra.mxu0 %v451
      %479 = vmatpush.msra.mxu0 %v450
      %480 = vmatpush.msra.mxu0 %v449
      %481 = vmatmul.f32.gmra.mxu0 %v446
      %v482 = vpop.f32.mrf.mxu0
      %v483 = vadd.f32 0.0, %v482
      %484 = vmatmul.f32.gmra.mxu0 %v447
      %v485 = vpop.f32.mrf.mxu0
      %v486 = vadd.f32 0.0, %v485
      %487 = vdwg.mxu0
      %488 = vmatpush.msra.mxu0 %v445
      %489 = vmatpush.msra.mxu0 %v444
      %490 = vmatpush.msra.mxu0 %v443
      %491 = vmatpush.msra.mxu0 %v442
      %492 = vmatpush.msra.mxu0 %v441
      %493 = vmatpush.msra.mxu0 %v440
      %494 = vmatpush.msra.mxu0 %v439
      %495 = vmatpush.msra.mxu0 %v438
      %496 = vmatpush.msra.mxu0 %v437
      %497 = vmatpush.msra.mxu0 %v436
      %498 = vmatpush.msra.mxu0 %v435
      %499 = vmatpush.msra.mxu0 %v434
      %500 = vmatpush.msra.mxu0 %v433
      %501 = vmatpush.msra.mxu0 %v432
      %502 = vmatpush.msra.mxu0 %v431
      %503 = vmatpush.msra.mxu0 %v430
      %504 = vmatmul.f32.gmra.mxu0 %v428
      %v505 = vpop.f32.mrf.mxu0
      %v506 = vadd.f32 %v483, %v505
      %507 = vmatmul.f32.gmra.mxu0 %v429
      %v508 = vpop.f32.mrf.mxu0
      %v509 = vadd.f32 %v486, %v508
      %510 = vdwg.mxu0
      %v511 = vld [vmem:[#allocation3 + $0x2] sm:$0xff]
      %v512 = vld [vmem:[#allocation3 + $0xa] sm:$0xff]
      %s513 = scalar_lea.vmem %s4, 256
      %v514 = vld [vmem:[%s513] sm:$0xff]
      %v515 = vld [vmem:[%s513 + $0x8] sm:$0xff]
      %v516 = vld [vmem:[%s513 + $0x10] sm:$0xff]
      %v517 = vld [vmem:[%s513 + $0x18] sm:$0xff]
      %v518 = vld [vmem:[%s513 + $0x20] sm:$0xff]
      %v519 = vld [vmem:[%s513 + $0x28] sm:$0xff]
      %v520 = vld [vmem:[%s513 + $0x30] sm:$0xff]
      %v521 = vld [vmem:[%s513 + $0x38] sm:$0xff]
      %v522 = vld [vmem:[%s513 + $0x40] sm:$0xff]
      %v523 = vld [vmem:[%s513 + $0x48] sm:$0xff]
      %v524 = vld [vmem:[%s513 + $0x50] sm:$0xff]
      %v525 = vld [vmem:[%s513 + $0x58] sm:$0xff]
      %v526 = vld [vmem:[%s513 + $0x60] sm:$0xff]
      %v527 = vld [vmem:[%s513 + $0x68] sm:$0xff]
      %v528 = vld [vmem:[%s513 + $0x70] sm:$0xff]
      %v529 = vld [vmem:[%s513 + $0x78] sm:$0xff]
      %530 = vmatpush.msra.mxu0 %v529
      %531 = vmatpush.msra.mxu0 %v528
      %532 = vmatpush.msra.mxu0 %v527
      %533 = vmatpush.msra.mxu0 %v526
      %534 = vmatpush.msra.mxu0 %v525
      %535 = vmatpush.msra.mxu0 %v524
      %536 = vmatpush.msra.mxu0 %v523
      %537 = vmatpush.msra.mxu0 %v522
      %538 = vmatpush.msra.mxu0 %v521
      %539 = vmatpush.msra.mxu0 %v520
      %540 = vmatpush.msra.mxu0 %v519
      %541 = vmatpush.msra.mxu0 %v518
      %542 = vmatpush.msra.mxu0 %v517
      %543 = vmatpush.msra.mxu0 %v516
      %544 = vmatpush.msra.mxu0 %v515
      %545 = vmatpush.msra.mxu0 %v514
      %546 = vmatmul.f32.gmra.mxu0 %v511
      %v547 = vpop.f32.mrf.mxu0
      %v548 = vadd.f32 0.0, %v547
      %549 = vmatmul.f32.gmra.mxu0 %v512
      %v550 = vpop.f32.mrf.mxu0
      %v551 = vadd.f32 0.0, %v550
      %552 = vdwg.mxu0
      %v553 = vadd.f32 %v506, %v548
      %v554 = vadd.f32 %v509, %v551
      %v555 = vld [vmem:[%s5] sm:$0x1]
      %v557 = vperm.slane %v555, 0
      %v559 = vmul.f32 %v553, %v557
      %v560 = vmul.f32 %v554, %v557
      %v561 = vld [vmem:[%s6] sm:$0x1]
      %v563 = vperm.slane %v561, 0
      %v565 = vadd.f32 %v559, %v563
      %v566 = vadd.f32 %v560, %v563
      %v567 = vmax.f32 %v565, 0.0
      %v568 = vmax.f32 %v566, 0.0
      %569 = vst [vmem:[%s278] sm:$0xff] %v567
      %570 = vst [vmem:[%s278 + $0x8] sm:$0xff] %v568
      %p571 = scmp.lt.s32.totalorder %s18, 1
      %s572 = scalar_select %p571, %s18, 1
      %s573 = smul.addr %s572, 2
      %s574 = smul.addr %s573, 8
      %s575 = scalar_lea.vmem %s7, %s574
      // Predicated region
      $region49: #{conv_block_forward.1} parent=47 // pred_check
        %p576 = pneg %p188
      $region50: #{conv_block_forward.1} parent=47 // pred_check_branch
        %578 = sbr.rel (%p576) target = $region52
      $region51: #{conv_block_forward.1} parent=47 // pred_region
        _
      $region52: #{conv_block_forward.1} parent=47 // pred_fallthru
        _
    $region48: #{conv_block_forward.1} parent=5 // pred_fallthru
      _
    %p579 = scmp.le.s32.totalorder 2, %s13
    // Predicated region
    $region53: #{conv_block_forward.1} parent=5 // pred_check
      %p580 = pneg %p579
    $region54: #{conv_block_forward.1} parent=5 // pred_check_branch
      %582 = sbr.rel (%p580) target = $region56
    $region55: #{conv_block_forward.1} parent=5 // pred_region
      %s583 = ssub.s32 %s13, 2
      // Predicated region
      $region57: #{conv_block_forward.1} parent=55 // pred_check
        %p584 = pneg %p194
      $region58: #{conv_block_forward.1} parent=55 // pred_check_branch
        %586 = sbr.rel (%p584) target = $region60
      $region59: #{conv_block_forward.1} parent=55 // pred_region
        %p587 = scmp.lt.s32.totalorder %s19, 1
        %s588 = scalar_select %p587, %s19, 1
        %s589 = smul.addr %s588, 2
        %s590 = smul.addr %s589, 8
        %s591 = scalar_lea.vmem %s7, %s590
      $region60: #{conv_block_forward.1} parent=55 // pred_fallthru
        _
    $region56: #{conv_block_forward.1} parent=5 // pred_fallthru
      _
  $region6: #{conv_block_forward.1} parent=0 // loop_footer
    %s17 = sadd.s32 1, %s13
  $region7: #{conv_block_forward.1} parent=0 // loop_footer_branch
    %12 = sbr.rel target = $region3
  $region8: #{conv_block_forward.1} parent=0 // loop_exit
    _

</llo_original>
